<compile_context>
chip_gen: v7x
topology: tpu7x:2x2x1
jax: 0.10.0
libtpu: 0.0.40
codegen_flags: <defaults>
</compile_context>

<pallas_src>
import functools

import jax
import jax.numpy as jnp
from jax.experimental import pallas as pl
from jax.experimental.pallas import tpu as pltpu

EPS = 1e-5
IN_F, H1_F, H2_F, OUT_F = 63, 128, 256, 29
IN_PAD, OUT_PAD = 64, 128          # lane/K-aligned padded feature dims


def _round_up(x, m):
    return (x + m - 1) // m * m


# --------------------------------------------------------------------------
# Kernel: one batch tile -> 3 matmuls + 2 ReLUs (BN folded, dropout = identity)
# --------------------------------------------------------------------------
def _mlp_kernel(x_ref, w1_ref, b1_ref, w2_ref, b2_ref, w3_ref, b3_ref, o_ref):
    # Linear(64->128) + ReLU          (input zero-padded 63->64)
    h1 = jnp.dot(x_ref[...], w1_ref[...], preferred_element_type=jnp.float32)
    h1 = jnp.maximum(h1 + b1_ref[...], 0.0).astype(w2_ref.dtype)

    # Linear(128->256) + ReLU         (BN1 folded into w2/b2)
    h2 = jnp.dot(h1, w2_ref[...], preferred_element_type=jnp.float32)
    h2 = jnp.maximum(h2 + b2_ref[...], 0.0).astype(w3_ref.dtype)

    # Linear(256->128 padded)         (BN2 folded into w3/b3; real out = 29)
    out = jnp.dot(h2, w3_ref[...], preferred_element_type=jnp.float32) + b3_ref[...]
    o_ref[...] = out.astype(o_ref.dtype)


# --------------------------------------------------------------------------
# Wrapper
# --------------------------------------------------------------------------
def landmark_classifier_forward(x, kparams, *, batch_tile=256):
    """x: (B, 63) float32.  kparams: folded/padded params (prepare_kernel_params)."""
    B = x.shape[0]
    compute_dtype = kparams["w1"].dtype
    align = 8 if jnp.dtype(compute_dtype).itemsize == 4 else 16

    # Batch tile: sublane-aligned, no larger than the (rounded) batch.
    tb = min(_round_up(batch_tile, align), _round_up(B, align))
    b_pad = _round_up(B, tb)

    # Pad input features 63 -> 64 and batch to a tile multiple.
    xp = jnp.pad(x, ((0, b_pad - B), (0, IN_PAD - IN_F))).astype(compute_dtype)

    const = lambda shape: pl.BlockSpec(shape, lambda i: (0, 0))  # VMEM-resident
    flops = 2 * b_pad * (IN_PAD * H1_F + H1_F * H2_F + H2_F * OUT_PAD)
    bytes_acc = (xp.size * xp.dtype.itemsize
                 + sum(kparams[k].size * kparams[k].dtype.itemsize
                       for k in ("w1", "b1", "w2", "b2", "w3", "b3"))
                 + b_pad * OUT_PAD * 4)

    out = pl.pallas_call(
        _mlp_kernel,
        out_shape=jax.ShapeDtypeStruct((b_pad, OUT_PAD), jnp.float32),
        grid_spec=pl.GridSpec(
            grid=(b_pad // tb,),
            in_specs=[
                pl.BlockSpec((tb, IN_PAD), lambda i: (i, 0)),   # x tile (pipelined)
                const((IN_PAD, H1_F)), const((1, H1_F)),        # w1, b1 (resident)
                const((H1_F, H2_F)), const((1, H2_F)),          # w2, b2
                const((H2_F, OUT_PAD)), const((1, OUT_PAD)),    # w3, b3
            ],
            out_specs=pl.BlockSpec((tb, OUT_PAD), lambda i: (i, 0)),
        ),
        compiler_params=pltpu.CompilerParams(
            dimension_semantics=("parallel",)),                 # megacore on v7x
        cost_estimate=pl.CostEstimate(
            flops=flops, transcendentals=0, bytes_accessed=bytes_acc),
    )(xp, kparams["w1"], kparams["b1"], kparams["w2"], kparams["b2"],
      kparams["w3"], kparams["b3"])
    return out[:B, :OUT_F]


# --------------------------------------------------------------------------
# Parameter setup: PyTorch-shaped params -> folded, padded, kernel-ready params
# --------------------------------------------------------------------------
def init_params(key):
    """Deterministic synthetic parameters matching the PyTorch module shapes
    (weights stored pre-transposed as (in_f, out_f))."""
    ks = jax.random.split(key, 14)

    def linear(kw, kb, fan_in, fan_out):
        bound = 1.0 / jnp.sqrt(fan_in)
        w = jax.random.uniform(kw, (fan_in, fan_out), jnp.float32, -bound, bound)
        b = jax.random.uniform(kb, (1, fan_out), jnp.float32, -bound, bound)
        return w, b

    w1, b1 = linear(ks[0], ks[1], IN_F, H1_F)
    w2, b2 = linear(ks[2], ks[3], H1_F, H2_F)
    w3, b3 = linear(ks[4], ks[5], H2_F, OUT_F)

    def bn(kg, kb_, km, kv, n):
        g = 1.0 + 0.1 * jax.random.normal(kg, (1, n), jnp.float32)
        bt = 0.1 * jax.random.normal(kb_, (1, n), jnp.float32)
        m = 0.1 * jax.random.normal(km, (1, n), jnp.float32)         # running_mean
        v = jax.random.uniform(kv, (1, n), jnp.float32, 0.5, 1.5)    # running_var
        return g, bt, m, v

    g1, bt1, m1, v1 = bn(ks[6], ks[7], ks[8], ks[9], H1_F)
    g2, bt2, m2, v2 = bn(ks[10], ks[11], ks[12], ks[13], H2_F)

    return dict(w1=w1, b1=b1, g1=g1, bt1=bt1, m1=m1, v1=v1,
                w2=w2, b2=b2, g2=g2, bt2=bt2, m2=m2, v2=v2,
                w3=w3, b3=b3)


def prepare_kernel_params(params, compute_dtype=jnp.float32):
    """Fold eval-mode BatchNorms into the next Linear, pad to lane-dense shapes,
    cast weights to the MXU compute dtype (biases stay f32)."""
    p = {k: v.astype(jnp.float32) for k, v in params.items()}

    s1 = p["g1"] * jax.lax.rsqrt(p["v1"] + EPS)          # (1, 128)
    t1 = p["bt1"] - p["m1"] * s1
    w2f = p["w2"] * s1[0][:, None]                       # (128, 256)
    b2f = p["b2"] + t1 @ p["w2"]                         # (1, 256)

    s2 = p["g2"] * jax.lax.rsqrt(p["v2"] + EPS)          # (1, 256)
    t2 = p["bt2"] - p["m2"] * s2
    w3f = p["w3"] * s2[0][:, None]                       # (256, 29)
    b3f = p["b3"] + t2 @ p["w3"]                         # (1, 29)

    w1p = jnp.pad(p["w1"], ((0, IN_PAD - IN_F), (0, 0)))           # (64, 128)
    w3p = jnp.pad(w3f, ((0, 0), (0, OUT_PAD - OUT_F)))             # (256, 128)
    b3p = jnp.pad(b3f, ((0, 0), (0, OUT_PAD - OUT_F)))             # (1, 128)

    return dict(w1=w1p.astype(compute_dtype), b1=p["b1"],
                w2=w2f.astype(compute_dtype), b2=b2f,
                w3=w3p.astype(compute_dtype), b3=b3p)


# --------------------------------------------------------------------------
# References
# --------------------------------------------------------------------------
def _reference(x, p, precision=None):
    """Unfolded eval-mode forward of the original PyTorch module."""
    dot = functools.partial(jnp.dot, precision=precision)
    h1 = jnp.maximum(dot(x, p["w1"]) + p["b1"], 0.0)
    h1 = (h1 - p["m1"]) * jax.lax.rsqrt(p["v1"] + EPS) * p["g1"] + p["bt1"]
    h2 = jnp.maximum(dot(h1, p["w2"]) + p["b2"], 0.0)
    h2 = (h2 - p["m2"]) * jax.lax.rsqrt(p["v2"] + EPS) * p["g2"] + p["bt2"]
    return dot(h2, p["w3"]) + p["b3"]


def _reference_folded(x, kp, precision=None):
    """Same math / operands as the kernel (BN folded, dims padded), plain jnp."""
    dot = functools.partial(jnp.dot, precision=precision)
    xp = jnp.pad(x, ((0, 0), (0, IN_PAD - IN_F))).astype(kp["w1"].dtype)
    h1 = jnp.maximum(dot(xp, kp["w1"], preferred_element_type=jnp.float32)
                     + kp["b1"], 0.0).astype(kp["w2"].dtype)
    h2 = jnp.maximum(dot(h1, kp["w2"], preferred_element_type=jnp.float32)
                     + kp["b2"], 0.0).astype(kp["w3"].dtype)
    out = dot(h2, kp["w3"], preferred_element_type=jnp.float32) + kp["b3"]
    return out[:, :OUT_F]


# --------------------------------------------------------------------------
if __name__ == "__main__":
    key = jax.random.PRNGKey(0)
    k_x, k_x2, k_p = jax.random.split(key, 3)

    params = init_params(k_p)

    # ---- f32 path, small batch ------------------------------------------
    B = 8
    x = jax.random.normal(k_x, (B, IN_F), jnp.float32)
    kp_f32 = prepare_kernel_params(params, jnp.float32)
    out = jax.block_until_ready(landmark_classifier_forward(x, kp_f32))
    assert out.shape == (B, OUT_F)

    # A) kernel vs identical-operand jnp reference (folded params)
    ref_folded = _reference_folded(x, kp_f32)
    assert jnp.allclose(out, ref_folded, atol=1e-3, rtol=1e-3), "kernel vs folded ref"
    # B) folding algebra vs the original module semantics (both high precision)
    ref_module = _reference(x, params, precision="highest")
    ref_folded_hi = _reference_folded(x, kp_f32, precision="highest")
    assert jnp.allclose(ref_folded_hi, ref_module, atol=1e-4, rtol=1e-4), "BN fold algebra"
    # C) end-to-end kernel vs module (covers any MXU precision differences)
    assert jnp.allclose(out, ref_module, atol=2e-2, rtol=2e-2), "kernel vs module"

    # ---- bf16 weights, larger non-multiple batch (tiled grid) -----------
    B2 = 300
    x2 = jax.random.normal(k_x2, (B2, IN_F), jnp.float32)
    kp_bf16 = prepare_kernel_params(params, jnp.bfloat16)
    out2 = jax.block_until_ready(
        landmark_classifier_forward(x2, kp_bf16, batch_tile=128))
    ref2 = _reference(x2, params, precision="highest")
    assert out2.shape == (B2, OUT_F)
    assert jnp.allclose(out2, ref2, atol=1e-1, rtol=1e-1), "bf16 kernel vs module"

    print("KERNEL_OK")
</pallas_src>

<mosaic_0001>
module attributes {stable_mosaic.version = 11 : i64} {
  func.func @_mlp_kernel(%arg0: i32, %arg1: memref<8x64xf32, #tpu.memory_space<vmem>>, %arg2: memref<64x128xf32, #tpu.memory_space<vmem>>, %arg3: memref<1x128xf32, #tpu.memory_space<vmem>>, %arg4: memref<128x256xf32, #tpu.memory_space<vmem>>, %arg5: memref<1x256xf32, #tpu.memory_space<vmem>>, %arg6: memref<256x128xf32, #tpu.memory_space<vmem>>, %arg7: memref<1x128xf32, #tpu.memory_space<vmem>>, %arg8: memref<8x128xf32, #tpu.memory_space<vmem>>) attributes {dimension_semantics = [#tpu.dimension_semantics<parallel>], iteration_bounds = array<i64: 1>, scalar_prefetch = 0 : i64, scratch_operands = 0 : i64, tpu.core_type = #tpu.core_type<tc>, window_params = [{transform_indices = @transform_0, window_bounds = array<i64: 8, 64>}, {pipeline_mode = #tpu.pipeline_mode<synchronous>, transform_indices = @transform_1, window_bounds = array<i64: 64, 128>}, {pipeline_mode = #tpu.pipeline_mode<synchronous>, transform_indices = @transform_2, window_bounds = array<i64: 1, 128>}, {pipeline_mode = #tpu.pipeline_mode<synchronous>, transform_indices = @transform_3, window_bounds = array<i64: 128, 256>}, {pipeline_mode = #tpu.pipeline_mode<synchronous>, transform_indices = @transform_4, window_bounds = array<i64: 1, 256>}, {pipeline_mode = #tpu.pipeline_mode<synchronous>, transform_indices = @transform_5, window_bounds = array<i64: 256, 128>}, {pipeline_mode = #tpu.pipeline_mode<synchronous>, transform_indices = @transform_6, window_bounds = array<i64: 1, 128>}, {transform_indices = @transform_7, window_bounds = array<i64: 8, 128>}]} {
    %c0 = arith.constant 0 : index
    %c0_0 = arith.constant 0 : index
    %0 = vector.load %arg1[%c0, %c0_0] : memref<8x64xf32, #tpu.memory_space<vmem>>, vector<8x64xf32>
    %c0_1 = arith.constant 0 : index
    %c0_2 = arith.constant 0 : index
    %1 = vector.load %arg2[%c0_1, %c0_2] : memref<64x128xf32, #tpu.memory_space<vmem>>, vector<64x128xf32>
    %cst = arith.constant dense<0.000000e+00> : vector<8x128xf32>
    %2 = tpu.matmul %0, %1, %cst {dimension_numbers = #tpu.dot_dimension_numbers<[1], [0], [0], [1], [0, 0, 1, 1], [], []>} : vector<8x64xf32>, vector<64x128xf32>, vector<8x128xf32> -> vector<8x128xf32>
    %c0_3 = arith.constant 0 : index
    %c0_4 = arith.constant 0 : index
    %3 = vector.load %arg3[%c0_3, %c0_4] : memref<1x128xf32, #tpu.memory_space<vmem>>, vector<1x128xf32>
    %4 = vector.broadcast %3 : vector<1x128xf32> to vector<8x128xf32>
    %5 = arith.addf %2, %4 : vector<8x128xf32>
    %cst_5 = arith.constant 0.000000e+00 : f32
    %6 = vector.broadcast %cst_5 : f32 to vector<8x128xf32>
    %7 = arith.maximumf %5, %6 : vector<8x128xf32>
    %c0_6 = arith.constant 0 : index
    %c0_7 = arith.constant 0 : index
    %8 = vector.load %arg4[%c0_6, %c0_7] : memref<128x256xf32, #tpu.memory_space<vmem>>, vector<128x256xf32>
    %cst_8 = arith.constant dense<0.000000e+00> : vector<8x256xf32>
    %9 = tpu.matmul %7, %8, %cst_8 {dimension_numbers = #tpu.dot_dimension_numbers<[1], [0], [0], [1], [0, 0, 1, 1], [], []>} : vector<8x128xf32>, vector<128x256xf32>, vector<8x256xf32> -> vector<8x256xf32>
    %c0_9 = arith.constant 0 : index
    %c0_10 = arith.constant 0 : index
    %10 = vector.load %arg5[%c0_9, %c0_10] : memref<1x256xf32, #tpu.memory_space<vmem>>, vector<1x256xf32>
    %11 = vector.broadcast %10 : vector<1x256xf32> to vector<8x256xf32>
    %12 = arith.addf %9, %11 : vector<8x256xf32>
    %cst_11 = arith.constant 0.000000e+00 : f32
    %13 = vector.broadcast %cst_11 : f32 to vector<8x256xf32>
    %14 = arith.maximumf %12, %13 : vector<8x256xf32>
    %c0_12 = arith.constant 0 : index
    %c0_13 = arith.constant 0 : index
    %15 = vector.load %arg6[%c0_12, %c0_13] : memref<256x128xf32, #tpu.memory_space<vmem>>, vector<256x128xf32>
    %cst_14 = arith.constant dense<0.000000e+00> : vector<8x128xf32>
    %16 = tpu.matmul %14, %15, %cst_14 {dimension_numbers = #tpu.dot_dimension_numbers<[1], [0], [0], [1], [0, 0, 1, 1], [], []>} : vector<8x256xf32>, vector<256x128xf32>, vector<8x128xf32> -> vector<8x128xf32>
    %c0_15 = arith.constant 0 : index
    %c0_16 = arith.constant 0 : index
    %17 = vector.load %arg7[%c0_15, %c0_16] : memref<1x128xf32, #tpu.memory_space<vmem>>, vector<1x128xf32>
    %18 = vector.broadcast %17 : vector<1x128xf32> to vector<8x128xf32>
    %19 = arith.addf %16, %18 : vector<8x128xf32>
    %c0_17 = arith.constant 0 : index
    %c0_18 = arith.constant 0 : index
    %20 = vector.load %arg8[%c0_17, %c0_18] : memref<8x128xf32, #tpu.memory_space<vmem>>, vector<8x128xf32>
    tpu.vector_store %arg8[%c0_17, %c0_18], %19 {strides = array<i32>} : memref<8x128xf32, #tpu.memory_space<vmem>>, vector<8x128xf32>,
    return
  }
  func.func @transform_0(%arg0: i32) -> (i32, i32) {
    %c0_i32 = arith.constant 0 : i32
    %c0_i32_0 = arith.constant 0 : i32
    return %arg0, %c0_i32 : i32, i32
  }
  func.func @transform_1(%arg0: i32) -> (i32, i32) {
    %c0_i32 = arith.constant 0 : i32
    %c0_i32_0 = arith.constant 0 : i32
    %c0_i32_1 = arith.constant 0 : i32
    return %c0_i32, %c0_i32_0 : i32, i32
  }
  func.func @transform_2(%arg0: i32) -> (i32, i32) {
    %c0_i32 = arith.constant 0 : i32
    %c0_i32_0 = arith.constant 0 : i32
    %c0_i32_1 = arith.constant 0 : i32
    return %c0_i32, %c0_i32_0 : i32, i32
  }
  func.func @transform_3(%arg0: i32) -> (i32, i32) {
    %c0_i32 = arith.constant 0 : i32
    %c0_i32_0 = arith.constant 0 : i32
    %c0_i32_1 = arith.constant 0 : i32
    return %c0_i32, %c0_i32_0 : i32, i32
  }
  func.func @transform_4(%arg0: i32) -> (i32, i32) {
    %c0_i32 = arith.constant 0 : i32
    %c0_i32_0 = arith.constant 0 : i32
    %c0_i32_1 = arith.constant 0 : i32
    return %c0_i32, %c0_i32_0 : i32, i32
  }
  func.func @transform_5(%arg0: i32) -> (i32, i32) {
    %c0_i32 = arith.constant 0 : i32
    %c0_i32_0 = arith.constant 0 : i32
    %c0_i32_1 = arith.constant 0 : i32
    return %c0_i32, %c0_i32_0 : i32, i32
  }
  func.func @transform_6(%arg0: i32) -> (i32, i32) {
    %c0_i32 = arith.constant 0 : i32
    %c0_i32_0 = arith.constant 0 : i32
    %c0_i32_1 = arith.constant 0 : i32
    return %c0_i32, %c0_i32_0 : i32, i32
  }
  func.func @transform_7(%arg0: i32) -> (i32, i32) {
    %c0_i32 = arith.constant 0 : i32
    %c0_i32_0 = arith.constant 0 : i32
    return %arg0, %c0_i32 : i32, i32
  }
}

</mosaic_0001>

<llo_original>
// kernel: tpu_custom_call.1
$region0: #{tpu_custom_call.1}
  #allocation0 [shape = 'u32[]', space=smem, size = 0x4, offset = 0x4, fixed_abs, tag = 'smem constant byte address 0x4 - core index']
  #allocation1 [shape = 'u32[144,128]{1,0:T(1,128)}', space=vmem, size = 0x12000, scoped, tag = 'internal scratch']
  %s0 = inlined_call_operand.hbm [shape: f32[8,64], index: 0, kind: input, shape index: {}]
  %s1 = inlined_call_operand.hbm [shape: f32[64,128], index: 1, kind: input, shape index: {}]
  %s2 = inlined_call_operand.vmem [shape: f32[1,128], index: 2, kind: input, shape index: {}]
  %s3 = inlined_call_operand.hbm [shape: f32[128,256], index: 3, kind: input, shape index: {}]
  %s4 = inlined_call_operand.vmem [shape: f32[1,256], index: 4, kind: input, shape index: {}]
  %s5 = inlined_call_operand.hbm [shape: f32[256,128], index: 5, kind: input, shape index: {}]
  %s6 = inlined_call_operand.vmem [shape: f32[1,128], index: 6, kind: input, shape index: {}]
  %s7 = inlined_call_operand.hbm [shape: f32[8,128], index: 7, kind: output, shape index: {}]
  %s8 = sld [smem:[#allocation0]]
  $region54: #{tpu_custom_call.1} parent=0
    _
  %s10 = ssub.s32 1, %s8
  %s11 = scalar_select 0, %s10, %s8
  $region1: #{tpu_custom_call.1} parent=0
    #allocation2 [shape = 'u8[4096]{0}', space=vmem, size = 0x1000, scoped, tag = 'input window, operand 0, single buffered']
    #allocation3 [shape = 's32[1]{0}', space=sflag, size = 0x4, scoped, tag = 'scoped memory for tpu_custom_call.1']
    #allocation4 [shape = 's32[1]{0}', space=sflag, size = 0x4, scoped, tag = 'scoped memory for tpu_custom_call.1']
    #allocation5 [shape = 'u8[32768]{0}', space=vmem, size = 0x8000, scoped, tag = 'input window, operand 1, single buffered']
    #allocation6 [shape = 's32[1]{0}', space=sflag, size = 0x4, scoped, tag = 'scoped memory for tpu_custom_call.1']
    #allocation7 [shape = 'u8[131072]{0}', space=vmem, size = 0x20000, scoped, tag = 'input window, operand 3, single buffered']
    #allocation8 [shape = 'u8[131072]{0}', space=vmem, size = 0x20000, scoped, tag = 'input window, operand 5, single buffered']
    #allocation9 [shape = 's32[1]{0}', space=sflag, size = 0x4, scoped, tag = 'scoped memory for tpu_custom_call.1']
    #allocation10 [shape = 'u8[4096]{0}', space=vmem, size = 0x1000, scoped, tag = 'output window, operand 0, single buffered']
    %12 = vsyncpa [#allocation3], 0
    %13 = vsyncpa [#allocation6], 0
    %14 = vsyncpa [#allocation9], 0
    %15 = vsyncpa [#allocation4], 0
    // Predicated region
    $region2: #{tpu_custom_call.1} parent=1 // pred_check
      _
    $region3: #{tpu_custom_call.1} parent=1 // pred_check_branch
      %17 = sbr.rel (0) target = $region5
    $region4: #{tpu_custom_call.1} parent=1 // pred_region
      %s19 = ssub.s32 128, 128
      %20 = vsyncadd [#allocation3], %s19
      %s22 = sshll.u32 [#allocation2], 4
      %s23 = int_to_ptr.vmem [resolvable:$true] %s22
      %25 = dma.hbm_to_vmem [thread:$0]  %s0, 128, %s23, [#allocation3]
    $region5: #{tpu_custom_call.1} parent=1 // pred_fallthru
      _
    // Predicated region
    $region6: #{tpu_custom_call.1} parent=1 // pred_check
      _
    $region7: #{tpu_custom_call.1} parent=1 // pred_check_branch
      %27 = sbr.rel (0) target = $region9
    $region8: #{tpu_custom_call.1} parent=1 // pred_region
      %s29 = ssub.s32 1024, 1024
      %30 = vsyncadd [#allocation6], %s29
      %s31 = sshll.u32 [#allocation5], 4
      %s32 = int_to_ptr.vmem [resolvable:$true] %s31
      %37 = dma.hbm_to_vmem [thread:$0]  %s1, 1024, %s32, [#allocation6], 128, 128, 8
    $region9: #{tpu_custom_call.1} parent=1 // pred_fallthru
      _
    // Predicated region
    $region10: #{tpu_custom_call.1} parent=1 // pred_check
      _
    $region11: #{tpu_custom_call.1} parent=1 // pred_check_branch
      %39 = sbr.rel (0) target = $region13
    $region12: #{tpu_custom_call.1} parent=1 // pred_region
      _
    $region13: #{tpu_custom_call.1} parent=1 // pred_fallthru
      _
    // Predicated region
    $region14: #{tpu_custom_call.1} parent=1 // pred_check
      _
    $region15: #{tpu_custom_call.1} parent=1 // pred_check_branch
      %41 = sbr.rel (0) target = $region17
    $region16: #{tpu_custom_call.1} parent=1 // pred_region
      %s43 = ssub.s32 4096, 4096
      %44 = vsyncadd [#allocation6], %s43
      %s45 = sshll.u32 [#allocation7], 4
      %s46 = int_to_ptr.vmem [resolvable:$true] %s45
      %51 = dma.hbm_to_vmem [thread:$0]  %s3, 4096, %s46, [#allocation6], 256, 256, 16
    $region17: #{tpu_custom_call.1} parent=1 // pred_fallthru
      _
    // Predicated region
    $region18: #{tpu_custom_call.1} parent=1 // pred_check
      _
    $region19: #{tpu_custom_call.1} parent=1 // pred_check_branch
      %53 = sbr.rel (0) target = $region21
    $region20: #{tpu_custom_call.1} parent=1 // pred_region
      _
    $region21: #{tpu_custom_call.1} parent=1 // pred_fallthru
      _
    // Predicated region
    $region22: #{tpu_custom_call.1} parent=1 // pred_check
      _
    $region23: #{tpu_custom_call.1} parent=1 // pred_check_branch
      %55 = sbr.rel (0) target = $region25
    $region24: #{tpu_custom_call.1} parent=1 // pred_region
      %s57 = ssub.s32 4096, 4096
      %58 = vsyncadd [#allocation9], %s57
      %s59 = sshll.u32 [#allocation8], 4
      %s60 = int_to_ptr.vmem [resolvable:$true] %s59
      %65 = dma.hbm_to_vmem [thread:$0]  %s5, 4096, %s60, [#allocation9], 128, 128, 8
    $region25: #{tpu_custom_call.1} parent=1 // pred_fallthru
      _
    // Predicated region
    $region26: #{tpu_custom_call.1} parent=1 // pred_check
      _
    $region27: #{tpu_custom_call.1} parent=1 // pred_check_branch
      %67 = sbr.rel (0) target = $region29
    $region28: #{tpu_custom_call.1} parent=1 // pred_region
      _
    $region29: #{tpu_custom_call.1} parent=1 // pred_fallthru
      _
    // Predicated region
    $region30: #{tpu_custom_call.1} parent=1 // pred_check
      _
    $region31: #{tpu_custom_call.1} parent=1 // pred_check_branch
      %69 = sbr.rel (0) target = $region33
    $region32: #{tpu_custom_call.1} parent=1 // pred_region
      %70 = dma.done [#allocation3], 128
    $region33: #{tpu_custom_call.1} parent=1 // pred_fallthru
      _
    // Predicated region
    $region34: #{tpu_custom_call.1} parent=1 // pred_check
      _
    $region35: #{tpu_custom_call.1} parent=1 // pred_check_branch
      %72 = sbr.rel (0) target = $region37
    $region36: #{tpu_custom_call.1} parent=1 // pred_region
      %73 = dma.done [#allocation6], 1024
    $region37: #{tpu_custom_call.1} parent=1 // pred_fallthru
      _
    // Predicated region
    $region38: #{tpu_custom_call.1} parent=1 // pred_check
      _
    $region39: #{tpu_custom_call.1} parent=1 // pred_check_branch
      %75 = sbr.rel (0) target = $region41
    $region40: #{tpu_custom_call.1} parent=1 // pred_region
      %76 = dma.done [#allocation6], 4096
    $region41: #{tpu_custom_call.1} parent=1 // pred_fallthru
      _
    // Predicated region
    $region42: #{tpu_custom_call.1} parent=1 // pred_check
      _
    $region43: #{tpu_custom_call.1} parent=1 // pred_check_branch
      %78 = sbr.rel (0) target = $region45
    $region44: #{tpu_custom_call.1} parent=1 // pred_region
      %79 = dma.done [#allocation9], 4096
    $region45: #{tpu_custom_call.1} parent=1 // pred_fallthru
      _
    %v80 = vld [vmem:[#allocation2] sm:$0xff]
    %v81 = vld [vmem:[#allocation5] sm:$0xff]
    %v82 = vld [vmem:[#allocation5 + $0x8] sm:$0xff]
    %v83 = vld [vmem:[#allocation5 + $0x10] sm:$0xff]
    %v84 = vld [vmem:[#allocation5 + $0x18] sm:$0xff]
    %v85 = vld [vmem:[#allocation5 + $0x20] sm:$0xff]
    %v86 = vld [vmem:[#allocation5 + $0x28] sm:$0xff]
    %v87 = vld [vmem:[#allocation5 + $0x30] sm:$0xff]
    %v88 = vld [vmem:[#allocation5 + $0x38] sm:$0xff]
    %v89 = vld [vmem:[%s2] sm:$0x1]
    %v91 = vlaneseq
    %v92 = vshrl.u32 %v91, 7
    %v93 = vsub.s32 0, %v92
    %v94 = vrot.slane %v89, %v93
    %vm96 = vcmask 523264
    %v98 = vsel %vm96, %v80, 0
    %100 = vmatprep.subr.mxu0 0.0
    %101 = vmatpush1.msra.mxu0 %v81
    %102 = vmatprep.subr.mxu0 0.0
    %103 = vmatpush1.msra.mxu0 %v82
    %104 = vmatprep.subr.mxu0 0.0
    %105 = vmatpush1.msra.mxu0 %v83
    %106 = vmatprep.subr.mxu0 0.0
    %107 = vmatpush1.msra.mxu0 %v84
    %108 = vmatprep.subr.mxu0 0.0
    %109 = vmatpush1.msra.mxu0 %v85
    %110 = vmatprep.subr.mxu0 0.0
    %111 = vmatpush1.msra.mxu0 %v86
    %112 = vmatprep.subr.mxu0 0.0
    %113 = vmatpush1.msra.mxu0 %v87
    %114 = vmatprep.subr.mxu0 0.0
    %115 = vmatpush1.msra.mxu0 %v88
    %116 = vmatprep.subr.mxu0 0.0
    %117 = vmatpush1.msra.mxu0 0.0
    %118 = vmatprep.subr.mxu0 0.0
    %119 = vmatpush1.msra.mxu0 0.0
    %120 = vmatprep.subr.mxu0 0.0
    %121 = vmatpush1.msra.mxu0 0.0
    %122 = vmatprep.subr.mxu0 0.0
    %123 = vmatpush1.msra.mxu0 0.0
    %124 = vmatprep.subr.mxu0 0.0
    %125 = vmatpush1.msra.mxu0 0.0
    %126 = vmatprep.subr.mxu0 0.0
    %127 = vmatpush1.msra.mxu0 0.0
    %128 = vmatprep.subr.mxu0 0.0
    %129 = vmatpush1.msra.mxu0 0.0
    %130 = vmatprep.subr.mxu0 0.0
    %131 = vmatpush1.msra.mxu0 0.0
    %132 = vmatprep.subr.mxu0 0.0
    %133 = vmatpush1.msra.mxu0 0.0
    %134 = vmatprep.subr.mxu0 0.0
    %135 = vmatpush1.msra.mxu0 0.0
    %136 = vmatprep.subr.mxu0 0.0
    %137 = vmatpush1.msra.mxu0 0.0
    %138 = vmatprep.subr.mxu0 0.0
    %139 = vmatpush1.msra.mxu0 0.0
    %140 = vmatprep.subr.mxu0 0.0
    %141 = vmatpush1.msra.mxu0 0.0
    %142 = vmatprep.subr.mxu0 0.0
    %143 = vmatpush1.msra.mxu0 0.0
    %144 = vmatprep.subr.mxu0 0.0
    %145 = vmatpush1.msra.mxu0 0.0
    %146 = vmatprep.subr.mxu0 0.0
    %147 = vmatpush1.msra.mxu0 0.0
    %148 = vmatprep.subr.mxu0 0.0
    %149 = vmatpush1.msra.mxu0 0.0
    %150 = vmatprep.subr.mxu0 0.0
    %151 = vmatpush1.msra.mxu0 0.0
    %152 = vmatprep.subr.mxu0 0.0
    %153 = vmatpush1.msra.mxu0 0.0
    %154 = vmatprep.subr.mxu0 0.0
    %155 = vmatpush1.msra.mxu0 0.0
    %156 = vmatprep.subr.mxu0 0.0
    %157 = vmatpush1.msra.mxu0 0.0
    %158 = vmatprep.subr.mxu0 0.0
    %159 = vmatpush1.msra.mxu0 0.0
    %160 = vmatprep.subr.mxu0 0.0
    %161 = vmatpush1.msra.mxu0 0.0
    %162 = vmatprep.subr.mxu0 0.0
    %163 = vmatpush1.msra.mxu0 0.0
    %164 = vmatprep.mubr.f32.mxu0 0.0
    %165 = vmatmul.mubr.f32.gmra.mrb[0].mxu0 %v98
    %v166 = vpop.f32.mrb[0].mxu0
    %v167 = vadd.f32 %v94, %v166
    %v168 = vpop.f32.mrb[0].mxu0
    %169 = vdwg.mxu0
    %v170 = vmax.f32 %v167, 0.0
    %v171 = vld [vmem:[#allocation7] sm:$0xff]
    %v172 = vld [vmem:[#allocation7 + $0x8] sm:$0xff]
    %v173 = vld [vmem:[#allocation7 + $0x10] sm:$0xff]
    %v174 = vld [vmem:[#allocation7 + $0x18] sm:$0xff]
    %v175 = vld [vmem:[#allocation7 + $0x20] sm:$0xff]
    %v176 = vld [vmem:[#allocation7 + $0x28] sm:$0xff]
    %v177 = vld [vmem:[#allocation7 + $0x30] sm:$0xff]
    %v178 = vld [vmem:[#allocation7 + $0x38] sm:$0xff]
    %v179 = vld [vmem:[#allocation7 + $0x40] sm:$0xff]
    %v180 = vld [vmem:[#allocation7 + $0x48] sm:$0xff]
    %v181 = vld [vmem:[#allocation7 + $0x50] sm:$0xff]
    %v182 = vld [vmem:[#allocation7 + $0x58] sm:$0xff]
    %v183 = vld [vmem:[#allocation7 + $0x60] sm:$0xff]
    %v184 = vld [vmem:[#allocation7 + $0x68] sm:$0xff]
    %v185 = vld [vmem:[#allocation7 + $0x70] sm:$0xff]
    %v186 = vld [vmem:[#allocation7 + $0x78] sm:$0xff]
    %v187 = vld [vmem:[#allocation7 + $0x80] sm:$0xff]
    %v188 = vld [vmem:[#allocation7 + $0x88] sm:$0xff]
    %v189 = vld [vmem:[#allocation7 + $0x90] sm:$0xff]
    %v190 = vld [vmem:[#allocation7 + $0x98] sm:$0xff]
    %v191 = vld [vmem:[#allocation7 + $0xa0] sm:$0xff]
    %v192 = vld [vmem:[#allocation7 + $0xa8] sm:$0xff]
    %v193 = vld [vmem:[#allocation7 + $0xb0] sm:$0xff]
    %v194 = vld [vmem:[#allocation7 + $0xb8] sm:$0xff]
    %v195 = vld [vmem:[#allocation7 + $0xc0] sm:$0xff]
    %v196 = vld [vmem:[#allocation7 + $0xc8] sm:$0xff]
    %v197 = vld [vmem:[#allocation7 + $0xd0] sm:$0xff]
    %v198 = vld [vmem:[#allocation7 + $0xd8] sm:$0xff]
    %v199 = vld [vmem:[#allocation7 + $0xe0] sm:$0xff]
    %v200 = vld [vmem:[#allocation7 + $0xe8] sm:$0xff]
    %v201 = vld [vmem:[#allocation7 + $0xf0] sm:$0xff]
    %v202 = vld [vmem:[#allocation7 + $0xf8] sm:$0xff]
    %v203 = vld [vmem:[%s4] sm:$0x3]
    %v205 = vlaneseq
    %v206 = vshrl.u32 %v205, 7
    %v207 = vsub.s32 0, %v206
    %v208 = vrot.slane %v203, %v207
    %v209 = vlaneseq
    %v210 = vshrl.u32 %v209, 7
    %v211 = vsub.s32 1, %v210
    %v212 = vrot.slane %v203, %v211
    %215 = vmatprep.subr.mxu0 %v172
    %216 = vmatpush1.msra.mxu0 %v171
    %217 = vmatprep.subr.mxu0 %v174
    %218 = vmatpush1.msra.mxu0 %v173
    %219 = vmatprep.subr.mxu0 %v176
    %220 = vmatpush1.msra.mxu0 %v175
    %221 = vmatprep.subr.mxu0 %v178
    %222 = vmatpush1.msra.mxu0 %v177
    %223 = vmatprep.subr.mxu0 %v180
    %224 = vmatpush1.msra.mxu0 %v179
    %225 = vmatprep.subr.mxu0 %v182
    %226 = vmatpush1.msra.mxu0 %v181
    %227 = vmatprep.subr.mxu0 %v184
    %228 = vmatpush1.msra.mxu0 %v183
    %229 = vmatprep.subr.mxu0 %v186
    %230 = vmatpush1.msra.mxu0 %v185
    %231 = vmatprep.subr.mxu0 %v188
    %232 = vmatpush1.msra.mxu0 %v187
    %233 = vmatprep.subr.mxu0 %v190
    %234 = vmatpush1.msra.mxu0 %v189
    %235 = vmatprep.subr.mxu0 %v192
    %236 = vmatpush1.msra.mxu0 %v191
    %237 = vmatprep.subr.mxu0 %v194
    %238 = vmatpush1.msra.mxu0 %v193
    %239 = vmatprep.subr.mxu0 %v196
    %240 = vmatpush1.msra.mxu0 %v195
    %241 = vmatprep.subr.mxu0 %v198
    %242 = vmatpush1.msra.mxu0 %v197
    %243 = vmatprep.subr.mxu0 %v200
    %244 = vmatpush1.msra.mxu0 %v199
    %245 = vmatprep.subr.mxu0 %v202
    %246 = vmatpush1.msra.mxu0 %v201
    %247 = vmatprep.subr.mxu0 0.0
    %248 = vmatpush1.msra.mxu0 0.0
    %249 = vmatprep.subr.mxu0 0.0
    %250 = vmatpush1.msra.mxu0 0.0
    %251 = vmatprep.subr.mxu0 0.0
    %252 = vmatpush1.msra.mxu0 0.0
    %253 = vmatprep.subr.mxu0 0.0
    %254 = vmatpush1.msra.mxu0 0.0
    %255 = vmatprep.subr.mxu0 0.0
    %256 = vmatpush1.msra.mxu0 0.0
    %257 = vmatprep.subr.mxu0 0.0
    %258 = vmatpush1.msra.mxu0 0.0
    %259 = vmatprep.subr.mxu0 0.0
    %260 = vmatpush1.msra.mxu0 0.0
    %261 = vmatprep.subr.mxu0 0.0
    %262 = vmatpush1.msra.mxu0 0.0
    %263 = vmatprep.subr.mxu0 0.0
    %264 = vmatpush1.msra.mxu0 0.0
    %265 = vmatprep.subr.mxu0 0.0
    %266 = vmatpush1.msra.mxu0 0.0
    %267 = vmatprep.subr.mxu0 0.0
    %268 = vmatpush1.msra.mxu0 0.0
    %269 = vmatprep.subr.mxu0 0.0
    %270 = vmatpush1.msra.mxu0 0.0
    %271 = vmatprep.subr.mxu0 0.0
    %272 = vmatpush1.msra.mxu0 0.0
    %273 = vmatprep.subr.mxu0 0.0
    %274 = vmatpush1.msra.mxu0 0.0
    %275 = vmatprep.subr.mxu0 0.0
    %276 = vmatpush1.msra.mxu0 0.0
    %277 = vmatprep.subr.mxu0 0.0
    %278 = vmatpush1.msra.mxu0 0.0
    %279 = vmatprep.mubr.f32.mxu0 0.0
    %280 = vmatmul.mubr.f32.gmra.mrb[0].mxu0 %v170
    %v281 = vpop.f32.mrb[0].mxu0
    %v282 = vadd.f32 %v208, %v281
    %v283 = vpop.f32.mrb[0].mxu0
    %v284 = vadd.f32 %v212, %v283
    %285 = vdwg.mxu0
    %v286 = vmax.f32 %v282, 0.0
    %v287 = vmax.f32 %v284, 0.0
    %v288 = vld [vmem:[#allocation8] sm:$0xff]
    %v289 = vld [vmem:[#allocation8 + $0x8] sm:$0xff]
    %v290 = vld [vmem:[#allocation8 + $0x10] sm:$0xff]
    %v291 = vld [vmem:[#allocation8 + $0x18] sm:$0xff]
    %v292 = vld [vmem:[#allocation8 + $0x20] sm:$0xff]
    %v293 = vld [vmem:[#allocation8 + $0x28] sm:$0xff]
    %v294 = vld [vmem:[#allocation8 + $0x30] sm:$0xff]
    %v295 = vld [vmem:[#allocation8 + $0x38] sm:$0xff]
    %v296 = vld [vmem:[#allocation8 + $0x40] sm:$0xff]
    %v297 = vld [vmem:[#allocation8 + $0x48] sm:$0xff]
    %v298 = vld [vmem:[#allocation8 + $0x50] sm:$0xff]
    %v299 = vld [vmem:[#allocation8 + $0x58] sm:$0xff]
    %v300 = vld [vmem:[#allocation8 + $0x60] sm:$0xff]
    %v301 = vld [vmem:[#allocation8 + $0x68] sm:$0xff]
    %v302 = vld [vmem:[#allocation8 + $0x70] sm:$0xff]
    %v303 = vld [vmem:[#allocation8 + $0x78] sm:$0xff]
    %v304 = vld [vmem:[#allocation8 + $0x80] sm:$0xff]
    %v305 = vld [vmem:[#allocation8 + $0x88] sm:$0xff]
    %v306 = vld [vmem:[#allocation8 + $0x90] sm:$0xff]
    %v307 = vld [vmem:[#allocation8 + $0x98] sm:$0xff]
    %v308 = vld [vmem:[#allocation8 + $0xa0] sm:$0xff]
    %v309 = vld [vmem:[#allocation8 + $0xa8] sm:$0xff]
    %v310 = vld [vmem:[#allocation8 + $0xb0] sm:$0xff]
    %v311 = vld [vmem:[#allocation8 + $0xb8] sm:$0xff]
    %v312 = vld [vmem:[#allocation8 + $0xc0] sm:$0xff]
    %v313 = vld [vmem:[#allocation8 + $0xc8] sm:$0xff]
    %v314 = vld [vmem:[#allocation8 + $0xd0] sm:$0xff]
    %v315 = vld [vmem:[#allocation8 + $0xd8] sm:$0xff]
    %v316 = vld [vmem:[#allocation8 + $0xe0] sm:$0xff]
    %v317 = vld [vmem:[#allocation8 + $0xe8] sm:$0xff]
    %v318 = vld [vmem:[#allocation8 + $0xf0] sm:$0xff]
    %v319 = vld [vmem:[#allocation8 + $0xf8] sm:$0xff]
    %v320 = vld [vmem:[%s6] sm:$0x1]
    %v322 = vlaneseq
    %v323 = vshrl.u32 %v322, 7
    %v324 = vsub.s32 0, %v323
    %v325 = vrot.slane %v320, %v324
    %327 = vmatprep.subr.mxu0 0.0
    %328 = vmatpush1.msra.mxu0 %v288
    %329 = vmatprep.subr.mxu0 0.0
    %330 = vmatpush1.msra.mxu0 %v289
    %331 = vmatprep.subr.mxu0 0.0
    %332 = vmatpush1.msra.mxu0 %v290
    %333 = vmatprep.subr.mxu0 0.0
    %334 = vmatpush1.msra.mxu0 %v291
    %335 = vmatprep.subr.mxu0 0.0
    %336 = vmatpush1.msra.mxu0 %v292
    %337 = vmatprep.subr.mxu0 0.0
    %338 = vmatpush1.msra.mxu0 %v293
    %339 = vmatprep.subr.mxu0 0.0
    %340 = vmatpush1.msra.mxu0 %v294
    %341 = vmatprep.subr.mxu0 0.0
    %342 = vmatpush1.msra.mxu0 %v295
    %343 = vmatprep.subr.mxu0 0.0
    %344 = vmatpush1.msra.mxu0 %v296
    %345 = vmatprep.subr.mxu0 0.0
    %346 = vmatpush1.msra.mxu0 %v297
    %347 = vmatprep.subr.mxu0 0.0
    %348 = vmatpush1.msra.mxu0 %v298
    %349 = vmatprep.subr.mxu0 0.0
    %350 = vmatpush1.msra.mxu0 %v299
    %351 = vmatprep.subr.mxu0 0.0
    %352 = vmatpush1.msra.mxu0 %v300
    %353 = vmatprep.subr.mxu0 0.0
    %354 = vmatpush1.msra.mxu0 %v301
    %355 = vmatprep.subr.mxu0 0.0
    %356 = vmatpush1.msra.mxu0 %v302
    %357 = vmatprep.subr.mxu0 0.0
    %358 = vmatpush1.msra.mxu0 %v303
    %359 = vmatprep.subr.mxu0 0.0
    %360 = vmatpush1.msra.mxu0 %v304
    %361 = vmatprep.subr.mxu0 0.0
    %362 = vmatpush1.msra.mxu0 %v305
    %363 = vmatprep.subr.mxu0 0.0
    %364 = vmatpush1.msra.mxu0 %v306
    %365 = vmatprep.subr.mxu0 0.0
    %366 = vmatpush1.msra.mxu0 %v307
    %367 = vmatprep.subr.mxu0 0.0
    %368 = vmatpush1.msra.mxu0 %v308
    %369 = vmatprep.subr.mxu0 0.0
    %370 = vmatpush1.msra.mxu0 %v309
    %371 = vmatprep.subr.mxu0 0.0
    %372 = vmatpush1.msra.mxu0 %v310
    %373 = vmatprep.subr.mxu0 0.0
    %374 = vmatpush1.msra.mxu0 %v311
    %375 = vmatprep.subr.mxu0 0.0
    %376 = vmatpush1.msra.mxu0 %v312
    %377 = vmatprep.subr.mxu0 0.0
    %378 = vmatpush1.msra.mxu0 %v313
    %379 = vmatprep.subr.mxu0 0.0
    %380 = vmatpush1.msra.mxu0 %v314
    %381 = vmatprep.subr.mxu0 0.0
    %382 = vmatpush1.msra.mxu0 %v315
    %383 = vmatprep.subr.mxu0 0.0
    %384 = vmatpush1.msra.mxu0 %v316
    %385 = vmatprep.subr.mxu0 0.0
    %386 = vmatpush1.msra.mxu0 %v317
    %387 = vmatprep.subr.mxu0 0.0
    %388 = vmatpush1.msra.mxu0 %v318
    %389 = vmatprep.subr.mxu0 0.0
    %390 = vmatpush1.msra.mxu0 %v319
    %391 = vmatprep.mubr.f32.mxu0 %v287
    %392 = vmatmul.mubr.f32.gmra.mrb[0].mxu0 %v286
    %v393 = vpop.f32.mrb[0].mxu0
    %v394 = vadd.f32 %v325, %v393
    %v395 = vpop.f32.mrb[0].mxu0
    %396 = vdwg.mxu0
    %397 = vst [vmem:[#allocation10] sm:$0xff] %v394
    // Predicated region
    $region46: #{tpu_custom_call.1} parent=1 // pred_check
      _
    $region47: #{tpu_custom_call.1} parent=1 // pred_check_branch
      %399 = sbr.rel (0) target = $region49
    $region48: #{tpu_custom_call.1} parent=1 // pred_region
      %s401 = ssub.s32 128, 128
      %402 = vsyncadd [#allocation4], %s401
      %s404 = sshll.u32 [#allocation10], 4
      %s405 = int_to_ptr.vmem [resolvable:$true] %s404
      %407 = dma.vmem_to_hbm [thread:$0]  %s405, 128, %s7, [#allocation4]
    $region49: #{tpu_custom_call.1} parent=1 // pred_fallthru
      _
    // Predicated region
    $region50: #{tpu_custom_call.1} parent=1 // pred_check
      _
    $region51: #{tpu_custom_call.1} parent=1 // pred_check_branch
      %409 = sbr.rel (0) target = $region53
    $region52: #{tpu_custom_call.1} parent=1 // pred_region
      %410 = dma.done [#allocation4], 128
    $region53: #{tpu_custom_call.1} parent=1 // pred_fallthru
      _
    %411 = vsyncpa [#allocation3], 1
    %412 = vsyncpa [#allocation6], 1
    %413 = vsyncpa [#allocation9], 1
    %414 = vsyncpa [#allocation4], 1

</llo_original>
